<compile_context>
chip_gen: v5e
topology: v5e:2x2
jax: 0.10.0
libtpu: 0.0.40
codegen_flags: <defaults>
</compile_context>

<pallas_src>
import jax
import jax.numpy as jnp
from jax.experimental import pallas as pl
from jax.experimental.pallas import tpu as pltpu

_LANE = 128
_SUBLANE = 8


def _identity_kernel(x_ref, o_ref):
    # Whole-tile copy: load the VMEM block and store it back. Scaffold for
    # future fused compute; fully hidden under the HBM DMAs on all gens.
    o_ref[...] = x_ref[...]


def _round_up(n: int, m: int) -> int:
    return ((n + m - 1) // m) * m


def _max_block_bytes() -> int:
    """Generation-aware per-block byte budget: 4 MiB on v7x (64 MiB VMEM/TC),
    8 MiB on v5e/v6e (128 MiB VMEM). Query is best-effort."""
    vmem = 64 * 1024 * 1024
    try:
        vmem = int(getattr(pltpu.get_tpu_info(), "vmem_capacity_bytes", vmem))
    except Exception:
        pass
    return (4 if vmem <= 64 * 1024 * 1024 else 8) * 1024 * 1024


def _choose_row_tile(rows: int, cols: int, itemsize: int) -> int:
    """Sublane-aligned row tile: capped by the generation-aware block budget,
    and forced to produce >= 2 grid blocks for mid-size tensors so the grid can
    pipeline DMAs and shard across v7x's two TensorCores."""
    budget = _max_block_bytes()
    cap = max(_SUBLANE, (budget // (cols * itemsize)) // _SUBLANE * _SUBLANE)
    tm = min(cap, rows)
    total_bytes = rows * cols * itemsize
    if tm >= rows and total_bytes > 512 * 1024 and rows >= 2 * _SUBLANE:
        tm = _round_up((rows + 1) // 2, _SUBLANE)
    return tm


def pallas_identity_copy(x: jax.Array) -> jax.Array:
    """Tiled, lane-dense HBM->VMEM->HBM copy of `x` via Pallas. Scaffold only —
    for the pure identity path prefer `network_forward`, which returns x."""
    orig_shape = x.shape
    total = int(x.size)
    if total == 0:
        return x
    itemsize = x.dtype.itemsize

    # Lane-dense layout: cols is a multiple of 128, flat size padded up so the
    # slab is exactly (rows, cols) with rows a multiple of 8. Every store is a
    # full-width vst; padding is at most (8*cols - 1) elements.
    cols = 1024 if total >= 1024 else _LANE
    rows = _round_up(pl.cdiv(total, cols), _SUBLANE)
    padded = rows * cols
    flat = x.reshape(-1)
    if padded != total:
        flat = jnp.pad(flat, (0, padded - total))
    x2d = flat.reshape(rows, cols)

    tm = _choose_row_tile(rows, cols, itemsize)
    grid = (pl.cdiv(rows, tm),)  # Pallas masks the partial tail block.
    block_bytes = tm * cols * itemsize
    # ~2 in + 2 out double buffers plus margin, capped well under v7x's VMEM.
    vmem_limit = min(32 * 1024 * 1024, max(8 * 1024 * 1024, 5 * block_bytes))

    out2d = pl.pallas_call(
        _identity_kernel,
        out_shape=jax.ShapeDtypeStruct((rows, cols), x.dtype),
        grid=grid,
        in_specs=[pl.BlockSpec((tm, cols), lambda i: (i, 0))],
        out_specs=pl.BlockSpec((tm, cols), lambda i: (i, 0)),
        compiler_params=pltpu.CompilerParams(
            dimension_semantics=("parallel",),  # shards across v7x's 2 TCs
            vmem_limit_bytes=vmem_limit,
        ),
        cost_estimate=pl.CostEstimate(
            flops=0,
            transcendentals=0,
            bytes_accessed=2 * padded * itemsize,
        ),
    )(x2d)

    if padded != total:
        return out2d.reshape(-1)[:total].reshape(orig_shape)
    return out2d.reshape(orig_shape)


def network_forward(x: jax.Array, clamped_output=None, *,
                    use_pallas_copy: bool = False) -> jax.Array:
    """Forward for the bare `Network` interface (no child layers): identity.

    Default path performs NO kernel launch and NO HBM traffic (review item 1).
    `use_pallas_copy=True` routes through the tiled Pallas copy scaffold.
    `clamped_output` is accepted for signature parity and ignored."""
    del clamped_output  # only consumed by concrete subclasses
    if not use_pallas_copy:
        return x
    return pallas_identity_copy(x)


class NetworkPallas:
    """Mirror of the PyTorch `Network` interface attributes (no parameters)."""

    def __init__(self, name: str, device: str) -> None:
        self.name = name
        self.device = device

    def forward(self, x: jax.Array, clamped_output=None, *,
                use_pallas_copy: bool = False) -> jax.Array:
        return network_forward(x, clamped_output, use_pallas_copy=use_pallas_copy)


if __name__ == "__main__":
    key = jax.random.PRNGKey(0)
    # Small NCHW input consistent with typical child-network usage.
    x = jax.random.normal(key, (2, 4, 16, 16), dtype=jnp.float32)

    net = NetworkPallas(name="interface_net", device="tpu")

    # Default (recommended) identity path: zero-cost, no kernel launch.
    y_fast = net.forward(x)
    assert y_fast.shape == x.shape and y_fast.dtype == x.dtype

    # Exercise the Pallas scaffold once for correctness.
    y_kernel = net.forward(x, use_pallas_copy=True)
    y_kernel = jax.block_until_ready(y_kernel)

    assert y_kernel.shape == x.shape and y_kernel.dtype == x.dtype
    assert bool(jnp.allclose(y_kernel, x)), "identity forward mismatch"
    assert bool(jnp.allclose(y_fast, x)), "fast-path identity mismatch"
    print("KERNEL_OK")
</pallas_src>

<mosaic_0001>
module attributes {stable_mosaic.version = 11 : i64} {
  func.func @_identity_kernel(%arg0: i32, %arg1: memref<8x1024xf32, #tpu.memory_space<vmem>>, %arg2: memref<8x1024xf32, #tpu.memory_space<vmem>>) attributes {dimension_semantics = [#tpu.dimension_semantics<parallel>], iteration_bounds = array<i64: 1>, scalar_prefetch = 0 : i64, scratch_operands = 0 : i64, tpu.core_type = #tpu.core_type<tc>, window_params = [{transform_indices = @transform_0, window_bounds = array<i64: 8, 1024>}, {transform_indices = @transform_1, window_bounds = array<i64: 8, 1024>}]} {
    %c0 = arith.constant 0 : index
    %c0_0 = arith.constant 0 : index
    %0 = vector.load %arg1[%c0, %c0_0] : memref<8x1024xf32, #tpu.memory_space<vmem>>, vector<8x1024xf32>
    %c0_1 = arith.constant 0 : index
    %c0_2 = arith.constant 0 : index
    %1 = vector.load %arg2[%c0_1, %c0_2] : memref<8x1024xf32, #tpu.memory_space<vmem>>, vector<8x1024xf32>
    tpu.vector_store %arg2[%c0_1, %c0_2], %0 {strides = array<i32>} : memref<8x1024xf32, #tpu.memory_space<vmem>>, vector<8x1024xf32>,
    return
  }
  func.func @transform_0(%arg0: i32) -> (i32, i32) {
    %c0_i32 = arith.constant 0 : i32
    %c0_i32_0 = arith.constant 0 : i32
    return %arg0, %c0_i32 : i32, i32
  }
  func.func @transform_1(%arg0: i32) -> (i32, i32) {
    %c0_i32 = arith.constant 0 : i32
    %c0_i32_0 = arith.constant 0 : i32
    return %arg0, %c0_i32 : i32, i32
  }
}

</mosaic_0001>

<llo_original>
// kernel: tpu_custom_call.1
$region0: #{tpu_custom_call.1}
  #allocation0 [shape = 'u32[]', space=smem, size = 0x4, offset = 0x4, fixed_abs, tag = 'smem constant byte address 0x4 - core index']
  #allocation1 [shape = 'u32[72,128]{1,0:T(1,128)}', space=vmem, size = 0x9000, scoped, tag = 'internal scratch']
  %s0 = inlined_call_operand.hbm [shape: f32[8,1024], index: 0, kind: input, shape index: {}]
  %s1 = inlined_call_operand.hbm [shape: f32[8,1024], index: 1, kind: output, shape index: {}]
  %s2 = sld [smem:[#allocation0]]
  $region18: #{tpu_custom_call.1} parent=0
    _
  %s4 = ssub.s32 1, %s2
  %s5 = scalar_select 0, %s4, %s2
  $region1: #{tpu_custom_call.1} parent=0
    #allocation2 [shape = 'u8[32768]{0}', space=vmem, size = 0x8000, scoped, tag = 'input window, operand 0, single buffered']
    #allocation3 [shape = 's32[1]{0}', space=sflag, size = 0x4, scoped, tag = 'scoped memory for tpu_custom_call.1']
    #allocation4 [shape = 's32[1]{0}', space=sflag, size = 0x4, scoped, tag = 'scoped memory for tpu_custom_call.1']
    #allocation5 [shape = 'u8[32768]{0}', space=vmem, size = 0x8000, scoped, tag = 'output window, operand 0, single buffered']
    %6 = vsyncpa [#allocation3], 0
    %7 = vsyncpa [#allocation4], 0
    // Predicated region
    $region2: #{tpu_custom_call.1} parent=1 // pred_check
      _
    $region3: #{tpu_custom_call.1} parent=1 // pred_check_branch
      %9 = sbr.rel (0) target = $region5
    $region4: #{tpu_custom_call.1} parent=1 // pred_region
      %11 = vsyncadd [#allocation3], 0
      %s13 = sshll.u32 %s0, 4
      %s14 = int_to_ptr.hbm [resolvable:$true] %s13
      %s15 = sshll.u32 [#allocation2], 4
      %s16 = int_to_ptr.vmem [resolvable:$true] %s15
      %18 = dma.hbm_to_vmem [thread:$0]  %s14, 1024, %s16, [#allocation3]
    $region5: #{tpu_custom_call.1} parent=1 // pred_fallthru
      _
    // Predicated region
    $region6: #{tpu_custom_call.1} parent=1 // pred_check
      _
    $region7: #{tpu_custom_call.1} parent=1 // pred_check_branch
      %20 = sbr.rel (0) target = $region9
    $region8: #{tpu_custom_call.1} parent=1 // pred_region
      %22 = dma.done [#allocation3], 1024
    $region9: #{tpu_custom_call.1} parent=1 // pred_fallthru
      _
    %v23 = vld [vmem:[#allocation2] sm:$0xff]
    %v24 = vld [vmem:[#allocation2 + $0x8] sm:$0xff]
    %v25 = vld [vmem:[#allocation2 + $0x10] sm:$0xff]
    %v26 = vld [vmem:[#allocation2 + $0x18] sm:$0xff]
    %v27 = vld [vmem:[#allocation2 + $0x20] sm:$0xff]
    %v28 = vld [vmem:[#allocation2 + $0x28] sm:$0xff]
    %v29 = vld [vmem:[#allocation2 + $0x30] sm:$0xff]
    %v30 = vld [vmem:[#allocation2 + $0x38] sm:$0xff]
    %31 = vst [vmem:[#allocation5] sm:$0xff] %v23
    %32 = vst [vmem:[#allocation5 + $0x8] sm:$0xff] %v24
    %33 = vst [vmem:[#allocation5 + $0x10] sm:$0xff] %v25
    %34 = vst [vmem:[#allocation5 + $0x18] sm:$0xff] %v26
    %35 = vst [vmem:[#allocation5 + $0x20] sm:$0xff] %v27
    %36 = vst [vmem:[#allocation5 + $0x28] sm:$0xff] %v28
    %37 = vst [vmem:[#allocation5 + $0x30] sm:$0xff] %v29
    %38 = vst [vmem:[#allocation5 + $0x38] sm:$0xff] %v30
    // Predicated region
    $region10: #{tpu_custom_call.1} parent=1 // pred_check
      _
    $region11: #{tpu_custom_call.1} parent=1 // pred_check_branch
      %40 = sbr.rel (0) target = $region13
    $region12: #{tpu_custom_call.1} parent=1 // pred_region
      %42 = vsyncadd [#allocation4], 0
      %s44 = sshll.u32 [#allocation5], 4
      %s45 = int_to_ptr.vmem [resolvable:$true] %s44
      %s46 = sshll.u32 %s1, 4
      %s47 = int_to_ptr.hbm [resolvable:$true] %s46
      %49 = dma.vmem_to_hbm [thread:$0]  %s45, 1024, %s47, [#allocation4]
    $region13: #{tpu_custom_call.1} parent=1 // pred_fallthru
      _
    // Predicated region
    $region14: #{tpu_custom_call.1} parent=1 // pred_check
      _
    $region15: #{tpu_custom_call.1} parent=1 // pred_check_branch
      %51 = sbr.rel (0) target = $region17
    $region16: #{tpu_custom_call.1} parent=1 // pred_region
      %53 = dma.done [#allocation4], 1024
    $region17: #{tpu_custom_call.1} parent=1 // pred_fallthru
      _
    %54 = vsyncpa [#allocation3], 1
    %55 = vsyncpa [#allocation4], 1

</llo_original>
